<compile_context>
chip_gen: v6e
topology: v6e:2x2x1
jax: 0.10.0
libtpu: 0.0.40
codegen_flags: <defaults>
</compile_context>

<pallas_src>
import functools
from typing import NamedTuple

import jax
import jax.numpy as jnp
from jax import lax
from jax.experimental import pallas as pl
from jax.experimental.pallas import tpu as pltpu


class Graph(NamedTuple):
    edges: jax.Array       # (B*N*k,) int32 — flat neighbor indices with batch offsets
    edge_feats: jax.Array  # (B*N*k, 3)     — pc[neighbor] - pc[origin]
    k_neighbors: int
    size: int              # B*N


def _knn_kernel(pc_all_ref, pc_q_ref, nbr_ref, dist_ref, *, n, k):
    """Per (batch, query-tile): k nearest-neighbor indices.

    pc_all_ref: (1, N, 3)    all points of this batch element
    pc_q_ref  : (1, TQ, 3)   query tile of the same batch element
    nbr_ref   : (1, k, TQ)   int32 neighbor indices, ascending distance
    dist_ref  : (N, TQ) f32  VMEM scratch — distance key, neighbors on sublanes
    """
    pc_all = pc_all_ref[0].astype(jnp.float32)                       # (N, 3)
    pc_q = pc_q_ref[0].astype(jnp.float32)                           # (TQ, 3)
    tq = pc_q.shape[0]

    # key[j, i] = ||p_j||^2 - 2 <p_j, q_i>   (query-constant ||q_i||^2 dropped;
    # it does not affect the per-query ordering).  One MXU matmul + one
    # lane-broadcast add — no second K=1 matmul, no (N,N) temporaries.
    sq = jnp.sum(pc_all * pc_all, axis=-1, keepdims=True)            # (N, 1)
    gram = lax.dot_general(-2.0 * pc_all, pc_q, (((1,), (1,)), ((), ())),
                           preferred_element_type=jnp.float32)       # (N, TQ)
    dist_ref[...] = gram + sq                                        # (N, TQ)

    row = lax.broadcasted_iota(jnp.int32, (n, tq), 0)                # neighbor ids
    big = jnp.float32(1e30)

    # k is small & static; iterative masked arg-min with smallest-index
    # tie-break (matches a stable argsort).  dist lives in the scratch ref so
    # live ranges stay bounded.
    @pl.loop(0, k)
    def _(step):
        d = dist_ref[...]
        minval = jnp.min(d, axis=0, keepdims=True)                   # (1, TQ)
        idx = jnp.min(jnp.where(d <= minval, row, n), axis=0,
                      keepdims=True)                                 # (1, TQ) i32
        nbr_ref[0, pl.ds(step, 1), :] = idx                          # lane-dense row
        dist_ref[...] = jnp.where(row == idx, big, d)                # mask selected


def _query_tile(n: int) -> int:
    """Largest convenient query tile: full N if small, else a 128-multiple divisor."""
    if n <= 512:
        return n
    for t in (512, 256, 128):
        if n % t == 0:
            return t
    return n  # fallback: single full-width tile


def flot_graph(pc: jax.Array, num_neighbors: int) -> Graph:
    """Pallas implementation of FlotGraph.forward(pc)."""
    B, N, D = pc.shape
    assert D == 3 and num_neighbors <= N
    k = num_neighbors
    tq = _query_tile(N)

    nbr_kn = pl.pallas_call(
        functools.partial(_knn_kernel, n=N, k=k),
        out_shape=jax.ShapeDtypeStruct((B, k, N), jnp.int32),
        grid=(B, N // tq),
        in_specs=[
            # Full point set of this batch (same block across q -> fetched once).
            pl.BlockSpec((1, N, 3), lambda b, q: (b, 0, 0)),
            # Query tile.
            pl.BlockSpec((1, tq, 3), lambda b, q: (b, q, 0)),
        ],
        out_specs=pl.BlockSpec((1, k, tq), lambda b, q: (b, 0, q)),
        scratch_shapes=[pltpu.VMEM((N, tq), jnp.float32)],
        compiler_params=pltpu.CompilerParams(
            dimension_semantics=("parallel", "parallel")),
    )(pc, pc)

    nbr = jnp.swapaxes(nbr_kn, 1, 2)                                 # (B, N, k)

    # Glue (matches torch): neighbors[b] += b*N; reshape(-1); per-batch edge feats.
    offsets = (jnp.arange(B, dtype=jnp.int32) * N)[:, None, None]
    edges = (nbr + offsets).reshape(-1)                              # (B*N*k,)
    gathered = jax.vmap(lambda p, idx: p[idx])(pc, nbr)              # (B, N, k, 3)
    edge_feats = (gathered - pc[:, :, None, :]).reshape(B * N * k, D)
    return Graph(edges=edges, edge_feats=edge_feats, k_neighbors=k, size=B * N)


def _flot_graph_ref(pc, k):
    """Pure-JAX reference mirroring the PyTorch code (verification only)."""
    B, N, _ = pc.shape
    sq = jnp.sum(pc ** 2, axis=-1, keepdims=True)
    dist = sq + jnp.swapaxes(sq, 1, 2) - 2.0 * jnp.einsum("bnd,bmd->bnm", pc, pc)
    nbr = jnp.argsort(dist, axis=-1)[:, :, :k]                       # (B, N, k)
    gathered = jax.vmap(lambda p, idx: p[idx])(pc, nbr)              # (B, N, k, 3)
    ef = (gathered - pc[:, :, None, :]).reshape(B * N * k, -1)
    edges = (nbr + (jnp.arange(B) * N)[:, None, None]).reshape(-1)
    return edges.astype(jnp.int32), ef


if __name__ == "__main__":
    key = jax.random.PRNGKey(0)
    B, N, k = 2, 16, 4          # small shapes; module default k=32 needs N >= 32
    pc = jax.random.normal(key, (B, N, 3), dtype=jnp.float32)

    graph = flot_graph(pc, num_neighbors=k)
    jax.block_until_ready(graph.edges)
    jax.block_until_ready(graph.edge_feats)

    # Lightweight self-check against the pure-JAX reference.
    edges_ref, ef_ref = _flot_graph_ref(pc, k)
    assert graph.edges.shape == (B * N * k,)
    assert graph.edge_feats.shape == (B * N * k, 3)
    assert graph.size == B * N and graph.k_neighbors == k
    assert bool(jnp.all(graph.edges == edges_ref))
    assert bool(jnp.allclose(graph.edge_feats, ef_ref, atol=1e-5, rtol=1e-5))

    print("KERNEL_OK")
</pallas_src>

<mosaic_0001>
module attributes {stable_mosaic.version = 11 : i64} {
  func.func @_knn_kernel(%arg0: i32, %arg1: i32, %arg2: memref<1x16x3xf32, #tpu.memory_space<vmem>>, %arg3: memref<1x16x3xf32, #tpu.memory_space<vmem>>, %arg4: memref<1x4x16xi32, #tpu.memory_space<vmem>>, %arg5: memref<16x16xf32, #tpu.memory_space<vmem>>) attributes {dimension_semantics = [#tpu.dimension_semantics<parallel>, #tpu.dimension_semantics<parallel>], iteration_bounds = array<i64: 2, 1>, scalar_prefetch = 0 : i64, scratch_operands = 1 : i64, tpu.core_type = #tpu.core_type<tc>, window_params = [{transform_indices = @transform_0, window_bounds = array<i64: 1, 16, 3>}, {transform_indices = @transform_1, window_bounds = array<i64: 1, 16, 3>}, {transform_indices = @transform_2, window_bounds = array<i64: 1, 4, 16>}]} {
    %c0 = arith.constant 0 : index
    %c0_0 = arith.constant 0 : index
    %c0_1 = arith.constant 0 : index
    %0 = vector.load %arg2[%c0, %c0_0, %c0_1] : memref<1x16x3xf32, #tpu.memory_space<vmem>>, vector<1x16x3xf32>
    %1 = vector.shape_cast %0 : vector<1x16x3xf32> to vector<16x3xf32>
    %c0_2 = arith.constant 0 : index
    %c0_3 = arith.constant 0 : index
    %c0_4 = arith.constant 0 : index
    %2 = vector.load %arg3[%c0_2, %c0_3, %c0_4] : memref<1x16x3xf32, #tpu.memory_space<vmem>>, vector<1x16x3xf32>
    %3 = vector.shape_cast %2 : vector<1x16x3xf32> to vector<16x3xf32>
    %4 = arith.mulf %1, %1 : vector<16x3xf32>
    %cst = arith.constant dense<0.000000e+00> : vector<16xf32>
    %5 = vector.multi_reduction <add>, %4, %cst [1] : vector<16x3xf32> to vector<16xf32>
    %6 = vector.shape_cast %5 : vector<16xf32> to vector<16x1xf32>
    %cst_5 = arith.constant -2.000000e+00 : f32
    %7 = vector.broadcast %cst_5 : f32 to vector<16x3xf32>
    %8 = arith.mulf %7, %1 : vector<16x3xf32>
    %cst_6 = arith.constant dense<0.000000e+00> : vector<16x16xf32>
    %9 = tpu.matmul %8, %3, %cst_6 {dimension_numbers = #tpu.dot_dimension_numbers<[1], [1], [0], [0], [0, 0, 1, 0], [], []>} : vector<16x3xf32>, vector<16x3xf32>, vector<16x16xf32> -> vector<16x16xf32>
    %10 = vector.broadcast %6 : vector<16x1xf32> to vector<16x16xf32>
    %11 = arith.addf %9, %10 : vector<16x16xf32>
    %c0_7 = arith.constant 0 : index
    %c0_8 = arith.constant 0 : index
    %12 = vector.load %arg5[%c0_7, %c0_8] : memref<16x16xf32, #tpu.memory_space<vmem>>, vector<16x16xf32>
    tpu.vector_store %arg5[%c0_7, %c0_8], %11 {strides = array<i32>} : memref<16x16xf32, #tpu.memory_space<vmem>>, vector<16x16xf32>,
    %13 = tpu.iota {dimensions = array<i32: 0>} : vector<16x16xi32>
    %cst_9 = arith.constant 1.000000e+30 : f32
    %c0_i32 = arith.constant 0 : i32
    %c4_i32 = arith.constant 4 : i32
    %14 = arith.addi %c0_i32, %c4_i32 : i32
    %c1_i32 = arith.constant 1 : i32
    scf.for %arg6 = %c0_i32 to %14 step %c1_i32  : i32 {
      %c1_i32_11 = arith.constant 1 : i32
      %15 = arith.muli %arg6, %c1_i32_11 : i32
      %c0_i32_12 = arith.constant 0 : i32
      %16 = arith.addi %c0_i32_12, %15 : i32
      %c0_13 = arith.constant 0 : index
      %c0_14 = arith.constant 0 : index
      %17 = vector.load %arg5[%c0_13, %c0_14] : memref<16x16xf32, #tpu.memory_space<vmem>>, vector<16x16xf32>
      %cst_15 = arith.constant dense<0x7F800000> : vector<16xf32>
      %18 = vector.multi_reduction <minimumf>, %17, %cst_15 [0] : vector<16x16xf32> to vector<16xf32>
      %19 = vector.shape_cast %18 : vector<16xf32> to vector<1x16xf32>
      %20 = vector.broadcast %19 : vector<1x16xf32> to vector<16x16xf32>
      %21 = arith.cmpf ole, %17, %20 : vector<16x16xf32>
      %c16_i32 = arith.constant 16 : i32
      %22 = vector.broadcast %c16_i32 : i32 to vector<16x16xi32>
      %23 = arith.select %21, %13, %22 : vector<16x16xi1>, vector<16x16xi32>
      %cst_16 = arith.constant dense<2147483647> : vector<16xi32>
      %24 = vector.multi_reduction <minsi>, %23, %cst_16 [0] : vector<16x16xi32> to vector<16xi32>
      %25 = vector.shape_cast %24 : vector<16xi32> to vector<1x16xi32>
      %c0_17 = arith.constant 0 : index
      %26 = arith.index_cast %16 : i32 to index
      %c0_18 = arith.constant 0 : index
      %27 = vector.load %arg4[%c0_17, %26, %c0_18] : memref<1x4x16xi32, #tpu.memory_space<vmem>>, vector<1x1x16xi32>
      %28 = vector.shape_cast %27 : vector<1x1x16xi32> to vector<1x16xi32>
      %29 = vector.shape_cast %25 : vector<1x16xi32> to vector<1x1x16xi32>
      tpu.vector_store %arg4[%c0_17, %26, %c0_18], %29 {strides = array<i32>} : memref<1x4x16xi32, #tpu.memory_space<vmem>>, vector<1x1x16xi32>,
      %30 = vector.broadcast %25 : vector<1x16xi32> to vector<16x16xi32>
      %31 = arith.cmpi eq, %13, %30 : vector<16x16xi32>
      %32 = vector.broadcast %cst_9 : f32 to vector<16x16xf32>
      %33 = arith.select %31, %32, %17 : vector<16x16xi1>, vector<16x16xf32>
      %c0_19 = arith.constant 0 : index
      %c0_20 = arith.constant 0 : index
      %34 = vector.load %arg5[%c0_19, %c0_20] : memref<16x16xf32, #tpu.memory_space<vmem>>, vector<16x16xf32>
      tpu.vector_store %arg5[%c0_19, %c0_20], %33 {strides = array<i32>} : memref<16x16xf32, #tpu.memory_space<vmem>>, vector<16x16xf32>,
    }
    %c4_i32_10 = arith.constant 4 : i32
    return
  }
  func.func @transform_0(%arg0: i32, %arg1: i32) -> (i32, i32, i32) {
    %c0_i32 = arith.constant 0 : i32
    %c0_i32_0 = arith.constant 0 : i32
    %c0_i32_1 = arith.constant 0 : i32
    return %arg0, %c0_i32, %c0_i32_0 : i32, i32, i32
  }
  func.func @transform_1(%arg0: i32, %arg1: i32) -> (i32, i32, i32) {
    %c0_i32 = arith.constant 0 : i32
    %c0_i32_0 = arith.constant 0 : i32
    return %arg0, %arg1, %c0_i32 : i32, i32, i32
  }
  func.func @transform_2(%arg0: i32, %arg1: i32) -> (i32, i32, i32) {
    %c0_i32 = arith.constant 0 : i32
    %c0_i32_0 = arith.constant 0 : i32
    return %arg0, %c0_i32, %arg1 : i32, i32, i32
  }
}

</mosaic_0001>

<llo_original>
// kernel: tpu_custom_call.1
$region0: #{tpu_custom_call.1}
  #allocation0 [shape = 'u32[]', space=smem, size = 0x4, offset = 0x4, fixed_abs, tag = 'smem constant byte address 0x4 - core index']
  #allocation1 [shape = 'u32[144,128]{1,0:T(1,128)}', space=vmem, size = 0x12000, scoped, tag = 'internal scratch']
  #allocation2 [shape = 'f32[16,16]{1,0:T(8,128)}', space=vmem, size = 0x2000, scoped, tag = 'scratch operand']
  %s0 = inlined_call_operand.vmem [shape: f32[2,16,3], index: 0, kind: input, shape index: {}]
  %s1 = inlined_call_operand.vmem [shape: f32[2,16,3], index: 1, kind: input, shape index: {}]
  %s2 = inlined_call_operand.hbm [shape: s32[2,4,16], index: 2, kind: output, shape index: {}]
  %s3 = sld [smem:[#allocation0]]
  $region48: #{tpu_custom_call.1} parent=0
    _
  %s5 = ssub.s32 1, %s3
  %s6 = scalar_select 0, %s5, %s3
  $region1: #{tpu_custom_call.1} parent=0
    #allocation3 [shape = 'u8[4096]{0}', space=vmem, size = 0x1000, scoped, tag = 'output window, operand 0']
    #allocation4 [shape = 's32[2]{0}', space=sflag, size = 0x8, scoped, tag = 'scoped memory for tpu_custom_call.1']
    %7 = vsyncpa [#allocation4], 0
    %s8 = scalar_lea.sflag [#allocation4], 1
    %9 = vsyncpa %s8, 0
    loop: start=0, step=1, limit=4
    $region2: #{tpu_custom_call.1} parent=1 // loop_pre_header
      _
    $region3: #{tpu_custom_call.1} parent=1 // loop_header
      %s11 = sphi 0, %s15
      %p12 = scmp.ge.s32.totalorder %s11, 4
      %s18 = sphi 0, %s30
      %s19 = sphi 0, %s26
      %s20 = sphi 0, %s18
      %s21 = sphi 0, %s19
      %s22 = sphi 0, %s20
      %s23 = sphi 0, %s21
      %s33 = sphi 0, %s35
      %s36 = sphi 0, %s33
      %s37 = sphi 0, %s36
      %s53 = sphi 0, %s37
      %s61 = sphi 0, %s63
      %s64 = sphi 0, %s61
      %s65 = sphi 0, %s64
      %s81 = sphi 0, %s65
      %s89 = sphi 0, %s91
      %s92 = sphi 0, %s89
      %s93 = sphi 0, %s92
      %s109 = sphi 0, %s93
    $region4: #{tpu_custom_call.1} parent=1 // loop_header_branch
      %14 = sbr.rel (%p12) target = $region8
    $region5: #{tpu_custom_call.1} parent=1 // loop_body
      %s16 = ssub.s32 %s11, 1
      %s17 = ssub.s32 %s11, 2
      %s24 = sadd.s32 1, %s19
      %p25 = scmp.ge.s32.totalorder %s24, 1
      %s26 = scalar_select %p25, 0, %s24
      %s27 = sadd.s32 1, %s18
      %s28 = scalar_select %p25, %s27, %s18
      %p29 = scmp.ge.s32.totalorder %s28, 2
      %s30 = scalar_select %p29, 0, %s28
      %s31 = ssub.s32 %s18, %s30
      %p32 = scmp.eq.s32.totalorder %s31, 0
      %s34 = sadd.s32 %s33, 1
      %s35 = scalar_select %p32, %s33, %s34
      %p38 = pneg %p32
      %p39 = scmp.eq.s32.totalorder %s11, 1
      %p40 = por %p38, %p39
      %p41 = scmp.ne.s32.totalorder %s33, %s36
      %p42 = scmp.eq.s32.totalorder %s11, 0
      %p43 = por %p41, %p42
      %p44 = scmp.ne.s32.totalorder %s33, %s36
      %p45 = scmp.eq.s32.totalorder %s16, 1
      %p46 = por %p44, %p45
      %p47 = scmp.ne.s32.totalorder %s36, %s37
      %p48 = scmp.eq.s32.totalorder %s16, 0
      %p49 = por %p47, %p48
      %p50 = scmp.ne.s32.totalorder %s36, %s37
      %p51 = scmp.eq.s32.totalorder %s17, 1
      %p52 = por %p50, %p51
      %p54 = scmp.ne.s32.totalorder %s37, %s53
      %p55 = scmp.eq.s32.totalorder %s17, 0
      %p56 = por %p54, %p55
      %s57 = ssub.s32 %s18, %s30
      %s58 = ssub.s32 %s19, %s26
      %s59 = sor.u32 %s57, %s58
      %p60 = scmp.eq.s32.totalorder %s59, 0
      %s62 = sadd.s32 %s61, 1
      %s63 = scalar_select %p60, %s61, %s62
      %p66 = pneg %p60
      %p67 = scmp.eq.s32.totalorder %s11, 1
      %p68 = por %p66, %p67
      %p69 = scmp.ne.s32.totalorder %s61, %s64
      %p70 = scmp.eq.s32.totalorder %s11, 0
      %p71 = por %p69, %p70
      %p72 = scmp.ne.s32.totalorder %s61, %s64
      %p73 = scmp.eq.s32.totalorder %s16, 1
      %p74 = por %p72, %p73
      %p75 = scmp.ne.s32.totalorder %s64, %s65
      %p76 = scmp.eq.s32.totalorder %s16, 0
      %p77 = por %p75, %p76
      %p78 = scmp.ne.s32.totalorder %s64, %s65
      %p79 = scmp.eq.s32.totalorder %s17, 1
      %p80 = por %p78, %p79
      %p82 = scmp.ne.s32.totalorder %s65, %s81
      %p83 = scmp.eq.s32.totalorder %s17, 0
      %p84 = por %p82, %p83
      %s85 = ssub.s32 %s18, %s30
      %s86 = ssub.s32 %s19, %s26
      %s87 = sor.u32 %s85, %s86
      %p88 = scmp.eq.s32.totalorder %s87, 0
      %s90 = sadd.s32 %s89, 1
      %s91 = scalar_select %p88, %s89, %s90
      %p94 = pneg %p88
      %p95 = scmp.eq.s32.totalorder %s11, 1
      %p96 = por %p94, %p95
      %p97 = scmp.ne.s32.totalorder %s89, %s92
      %p98 = scmp.eq.s32.totalorder %s11, 0
      %p99 = por %p97, %p98
      %p100 = scmp.ne.s32.totalorder %s89, %s92
      %p101 = scmp.eq.s32.totalorder %s16, 1
      %p102 = por %p100, %p101
      %p103 = scmp.ne.s32.totalorder %s92, %s93
      %p104 = scmp.eq.s32.totalorder %s16, 0
      %p105 = por %p103, %p104
      %p106 = scmp.ne.s32.totalorder %s92, %s93
      %p107 = scmp.eq.s32.totalorder %s17, 1
      %p108 = por %p106, %p107
      %p110 = scmp.ne.s32.totalorder %s93, %s109
      %p111 = scmp.eq.s32.totalorder %s17, 0
      %p112 = por %p110, %p111
      %p113 = scmp.le.s32.totalorder 1, %s11
      %p114 = scmp.lt.s32.totalorder %s11, 3
      %p115 = pnand %p113, %p114
      %p116 = pneg %p115
      // Predicated region
      $region9: #{tpu_custom_call.1} parent=5 // pred_check
        _
      $region10: #{tpu_custom_call.1} parent=5 // pred_check_branch
        %118 = sbr.rel (%p115) target = $region12
      $region11: #{tpu_custom_call.1} parent=5 // pred_region
        %s119 = ssub.s32 %s11, 1
      $region12: #{tpu_custom_call.1} parent=5 // pred_fallthru
        _
      %p120 = scmp.lt.s32.totalorder %s11, 2
      // Predicated region
      $region13: #{tpu_custom_call.1} parent=5 // pred_check
        %p121 = pneg %p120
      $region14: #{tpu_custom_call.1} parent=5 // pred_check_branch
        %123 = sbr.rel (%p121) target = $region16
      $region15: #{tpu_custom_call.1} parent=5 // pred_region
        // Predicated region
        $region17: #{tpu_custom_call.1} parent=15 // pred_check
          %p124 = pneg %p43
        $region18: #{tpu_custom_call.1} parent=15 // pred_check_branch
          %126 = sbr.rel (%p124) target = $region20
        $region19: #{tpu_custom_call.1} parent=15 // pred_region
          %p127 = scmp.lt.s32.totalorder %s18, 1
          %s128 = scalar_select %p127, %s18, 1
          %s129 = smul.addr %s128, 2
          %s130 = smul.addr %s129, 8
          %s131 = scalar_lea.vmem %s0, %s130
        $region20: #{tpu_custom_call.1} parent=15 // pred_fallthru
          _
        // Predicated region
        $region21: #{tpu_custom_call.1} parent=15 // pred_check
          %p132 = pneg %p71
        $region22: #{tpu_custom_call.1} parent=15 // pred_check_branch
          %134 = sbr.rel (%p132) target = $region24
        $region23: #{tpu_custom_call.1} parent=15 // pred_region
          %s135 = smul.u32 2, %s19
          %p136 = scmp.lt.s32.totalorder %s18, 1
          %s137 = scalar_select %p136, %s18, 1
          %p138 = scmp.lt.s32.totalorder %s135, 1
          %s139 = scalar_select %p138, %s135, 1
          %s140 = smul.addr %s137, 2
          %s141 = sadd.s32 %s139, %s140
          %s142 = smul.addr %s141, 8
          %s143 = scalar_lea.vmem %s1, %s142
          %s144 = smul.u32 2, %s19
        $region24: #{tpu_custom_call.1} parent=15 // pred_fallthru
          _
      $region16: #{tpu_custom_call.1} parent=5 // pred_fallthru
        _
      %p145 = scmp.le.s32.totalorder 1, %s11
      %p146 = scmp.lt.s32.totalorder %s11, 3
      %p147 = pnand %p145, %p146
      %p148 = pneg %p147
      // Predicated region
      $region25: #{tpu_custom_call.1} parent=5 // pred_check
        _
      $region26: #{tpu_custom_call.1} parent=5 // pred_check_branch
        %150 = sbr.rel (%p147) target = $region28
      $region27: #{tpu_custom_call.1} parent=5 // pred_region
        %s151 = ssub.s32 %s11, 1
        %p152 = scmp.lt.s32.totalorder %s20, 1
        %s153 = scalar_select %p152, %s20, 1
        %s154 = smul.addr %s153, 2
        %s155 = smul.addr %s154, 8
        %s156 = scalar_lea.vmem %s0, %s155
        %p157 = pneg %p49
        %p158 = pneg %p46
        %s159 = smul.u32 2, %s21
        %p160 = scmp.lt.s32.totalorder %s20, 1
        %s161 = scalar_select %p160, %s20, 1
        %p162 = scmp.lt.s32.totalorder %s159, 1
        %s163 = scalar_select %p162, %s159, 1
        %s164 = smul.addr %s161, 2
        %s165 = sadd.s32 %s163, %s164
        %s166 = smul.addr %s165, 8
        %s167 = scalar_lea.vmem %s1, %s166
        %p168 = pneg %p77
        %p169 = pneg %p74
        %p170 = pneg %p105
        %p171 = pneg %p102
        %s172 = sand.u32 %s92, 1
        %s173 = scalar_lea.sflag [#allocation4], %s172
        %s174 = sand.u32 %s92, 1
        %s175 = smul.addr %s174, 4
        %s176 = scalar_lea.vmem [#allocation3], %s175
        %p177 = scmp.lt.s32.totalorder %s20, 1
        %s178 = scalar_select %p177, %s20, 1
        %s179 = smul.addr %s178, 2
        %s180 = smul.addr %s179, 8
        %s181 = scalar_lea.vmem %s0, %s180
        %s182 = smul.u32 2, %s21
        %p183 = scmp.lt.s32.totalorder %s20, 1
        %s184 = scalar_select %p183, %s20, 1
        %p185 = scmp.lt.s32.totalorder %s182, 1
        %s186 = scalar_select %p185, %s182, 1
        %s187 = smul.addr %s184, 2
        %s188 = sadd.s32 %s186, %s187
        %s189 = smul.addr %s188, 8
        %s190 = scalar_lea.vmem %s1, %s189
        %s191 = smul.u32 2, %s21
        %v192 = vld [vmem:[%s181] sm:$0xff]
        %v193 = vld [vmem:[%s181 + $0x8] sm:$0xff]
        %v194 = vld [vmem:[%s190] sm:$0xff]
        %v195 = vld [vmem:[%s190 + $0x8] sm:$0xff]
        %v196 = vmul.f32 %v192, %v192
        %v197 = vmul.f32 %v193, %v193
        %vm198 = vcmask 23552
        %v199 = vsel %vm198, %v196, 0.0
        %200 = vadd.xlane.f32.xlu0 %v199
        %v201 = vpop.xlane.xlu0 %200
        %v202 = vsel %vm198, %v197, 0.0
        %203 = vadd.xlane.f32.xlu0 %v202
        %v204 = vpop.xlane.xlu0 %203
        %v205 = vmul.f32 %v192, -2.0
        %v206 = vmul.f32 %v193, -2.0
        %v208 = vsel %vm198, %v205, 0
        %v211 = vsel %vm198, %v206, 0
        %v214 = vsel %vm198, %v194, 0
        %v217 = vsel %vm198, %v195, 0
        %219 = vmatprep.subr.mxu0 0.0
        %220 = vmatpush1.xpose.msra.mxu0 0.0
        %221 = vmatprep.subr.mxu0 0.0
        %222 = vmatpush1.xpose.msra.mxu0 0.0
        %223 = vmatprep.subr.mxu0 0.0
        %224 = vmatpush1.xpose.msra.mxu0 0.0
        %225 = vmatprep.subr.mxu0 0.0
        %226 = vmatpush1.xpose.msra.mxu0 0.0
        %227 = vmatprep.subr.mxu0 0.0
        %228 = vmatpush1.xpose.msra.mxu0 0.0
        %229 = vmatprep.subr.mxu0 0.0
        %230 = vmatpush1.xpose.msra.mxu0 0.0
        %231 = vmatprep.subr.mxu0 0.0
        %232 = vmatpush1.xpose.msra.mxu0 0.0
        %233 = vmatprep.subr.mxu0 0.0
        %234 = vmatpush1.xpose.msra.mxu0 0.0
        %235 = vmatprep.subr.mxu0 0.0
        %236 = vmatpush1.xpose.msra.mxu0 0.0
        %237 = vmatprep.subr.mxu0 0.0
        %238 = vmatpush1.xpose.msra.mxu0 0.0
        %239 = vmatprep.subr.mxu0 0.0
        %240 = vmatpush1.xpose.msra.mxu0 0.0
        %241 = vmatprep.subr.mxu0 0.0
        %242 = vmatpush1.xpose.msra.mxu0 0.0
        %243 = vmatprep.subr.mxu0 0.0
        %244 = vmatpush1.xpose.msra.mxu0 0.0
        %245 = vmatprep.subr.mxu0 0.0
        %246 = vmatpush1.xpose.msra.mxu0 0.0
        %247 = vmatprep.subr.mxu0 0.0
        %248 = vmatpush1.xpose.msra.mxu0 %v217
        %249 = vmatprep.subr.mxu0 0.0
        %250 = vmatpush1.xpose.msra.mxu0 %v214
        %251 = vmatprep.subr.mxu0 0.0
        %252 = vmatpush2.xpose.msra.mxu0 0.0
        %253 = vmatprep.subr.mxu0 0.0
        %254 = vmatpush2.xpose.msra.mxu0 0.0
        %255 = vmatprep.subr.mxu0 0.0
        %256 = vmatpush2.xpose.msra.mxu0 0.0
        %257 = vmatprep.subr.mxu0 0.0
        %258 = vmatpush2.xpose.msra.mxu0 0.0
        %259 = vmatprep.subr.mxu0 0.0
        %260 = vmatpush2.xpose.msra.mxu0 0.0
        %261 = vmatprep.subr.mxu0 0.0
        %262 = vmatpush2.xpose.msra.mxu0 0.0
        %263 = vmatprep.subr.mxu0 0.0
        %264 = vmatpush2.xpose.msra.mxu0 0.0
        %265 = vmatprep.subr.mxu0 0.0
        %266 = vmatpush2.xpose.msra.mxu0 0.0
        %267 = vmatprep.subr.mxu0 0.0
        %268 = vmatpush2.xpose.msra.mxu0 0.0
        %269 = vmatprep.subr.mxu0 0.0
        %270 = vmatpush2.xpose.msra.mxu0 0.0
        %271 = vmatprep.subr.mxu0 0.0
        %272 = vmatpush2.xpose.msra.mxu0 0.0
        %273 = vmatprep.subr.mxu0 0.0
        %274 = vmatpush2.xpose.msra.mxu0 0.0
        %275 = vmatprep.subr.mxu0 0.0
        %276 = vmatpush2.xpose.msra.mxu0 0.0
        %277 = vmatprep.subr.mxu0 0.0
        %278 = vmatpush2.xpose.msra.mxu0 0.0
        %279 = vmatprep.subr.mxu0 0.0
        %280 = vmatpush2.xpose.msra.mxu0 0.0
        %281 = vmatprep.subr.mxu0 0.0
        %282 = vmatpush2.xpose.msra.mxu0 0.0
        %283 = vmatprep.mubr.f32.mxu0 0.0
        %284 = vmatmul.mubr.f32.gmra.mxu0 %v208
        %v285 = vpop.f32.mrf.mxu0
        %v286 = vadd.f32 %v201, %v285
        %v287 = vpop.f32.mrf.mxu0
        %288 = vmatprep.mubr.f32.mxu0 0.0
        %289 = vmatmul.mubr.f32.gmra.mxu0 %v211
        %v290 = vpop.f32.mrf.mxu0
        %v291 = vadd.f32 %v204, %v290
        %v292 = vpop.f32.mrf.mxu0
        %293 = vdwg.mxu0
        %vm294 = vcmask 130048
        %295 = vst.msk [vmem:[#allocation2] sm:$0xff] %vm294, %v286
        %296 = vst.msk [vmem:[#allocation2 + $0x8] sm:$0xff] %vm294, %v291
        %v297 = vlaneseq
        %v298 = vshrl.u32 %v297, 7
        %v299 = vadd.s32 %v298, 8
        loop: start=0, step=1, limit=4
        $region29: #{tpu_custom_call.1} parent=27 // loop_pre_header
          _
        $region30: #{tpu_custom_call.1} parent=27 // loop_header
          %s301 = sphi 0, %s305
          %p302 = scmp.ge.s32.totalorder %s301, 4
        $region31: #{tpu_custom_call.1} parent=27 // loop_header_branch
          %304 = sbr.rel (%p302) target = $region35
        $region32: #{tpu_custom_call.1} parent=27 // loop_body
          %v306 = vld [vmem:[#allocation2] sm:$0xff]
          %v307 = vld [vmem:[#allocation2 + $0x8] sm:$0xff]
          %v308 = vsel %vm294, %v306, inf
          %v309 = vsel %vm294, %v307, inf
          %v310 = vmin.f32 %v308, %v309
          %v311 = vrot.slane %v310, 4
          %v312 = vmin.f32 %v310, %v311
          %v313 = vrot.slane %v312, 2
          %v314 = vmin.f32 %v312, %v313
          %v315 = vrot.slane %v314, 1
          %v316 = vmin.f32 %v314, %v315
          %vm317 = vcmp.le.f32.partialorder %v306, %v316
          %vm318 = vcmp.le.f32.partialorder %v307, %v316
          %v319 = vsel %vm317, %v298, 16
          %v320 = vsel %vm318, %v299, 16
          %v321 = vsel %vm294, %v319, 2147483647
          %v322 = vsel %vm294, %v320, 2147483647
          %vm323 = vcmp.lt.s32.totalorder %v321, %v322
          %v324 = vsel %vm323, %v321, %v322
          %v325 = vrot.slane %v324, 4
          %vm326 = vcmp.lt.s32.totalorder %v324, %v325
          %v327 = vsel %vm326, %v324, %v325
          %v328 = vrot.slane %v327, 2
          %vm329 = vcmp.lt.s32.totalorder %v327, %v328
          %v330 = vsel %vm329, %v327, %v328
          %v331 = vrot.slane %v330, 1
          %vm332 = vcmp.lt.s32.totalorder %v330, %v331
          %v333 = vsel %vm332, %v330, %v331
          %s334 = scalar_lea.vmem %s176, %s301 [#allocation3]
          %vm335 = vcmask 122880
          %336 = vst.msk [vmem:[%s334] sm:$0x1] %vm335, %v333
          %vm337 = vcmp.eq.s32.totalorder %v298, %v333
          %vm338 = vcmp.eq.s32.totalorder %v299, %v333
          %v339 = vsel %vm337, 1e+30, %v306
          %v340 = vsel %vm338, 1e+30, %v307
          %341 = vst.msk [vmem:[#allocation2] sm:$0xff] %vm294, %v339
          %342 = vst.msk [vmem:[#allocation2 + $0x8] sm:$0xff] %vm294, %v340
        $region33: #{tpu_custom_call.1} parent=27 // loop_footer
          %s305 = sadd.s32 1, %s301
        $region34: #{tpu_custom_call.1} parent=27 // loop_footer_branch
          %300 = sbr.rel target = $region30
        $region35: #{tpu_custom_call.1} parent=27 // loop_exit
          _
        %s343 = sand.u32 %s92, 1
        %s344 = scalar_lea.sflag [#allocation4], %s343
        %s345 = sand.u32 %s92, 1
        %s346 = smul.addr %s345, 4
        %s347 = scalar_lea.vmem [#allocation3], %s346
        // Predicated region
        $region36: #{tpu_custom_call.1} parent=27 // pred_check
          %p348 = pneg %p102
        $region37: #{tpu_custom_call.1} parent=27 // pred_check_branch
          %350 = sbr.rel (%p348) target = $region39
        $region38: #{tpu_custom_call.1} parent=27 // pred_region
          %s352 = ssub.s32 64, 64
          %353 = vsyncadd %s344, %s352
          %s354 = sadd.s32 %s21, %s20
          %s355 = smul.addr %s354, 64
          %s356 = scalar_lea.hbm %s2, %s355
          %s358 = sshll.u32 %s347, 4
          %s359 = int_to_ptr.vmem [resolvable:$true] %s358
          %361 = dma.vmem_to_hbm [thread:$0]  %s359, 64, %s356, %s344
        $region39: #{tpu_custom_call.1} parent=27 // pred_fallthru
          _
      $region28: #{tpu_custom_call.1} parent=5 // pred_fallthru
        _
      %p362 = scmp.le.s32.totalorder 2, %s11
      // Predicated region
      $region40: #{tpu_custom_call.1} parent=5 // pred_check
        %p363 = pneg %p362
      $region41: #{tpu_custom_call.1} parent=5 // pred_check_branch
        %365 = sbr.rel (%p363) target = $region43
      $region42: #{tpu_custom_call.1} parent=5 // pred_region
        %s366 = ssub.s32 %s11, 2
        // Predicated region
        $region44: #{tpu_custom_call.1} parent=42 // pred_check
          %p367 = pneg %p108
        $region45: #{tpu_custom_call.1} parent=42 // pred_check_branch
          %369 = sbr.rel (%p367) target = $region47
        $region46: #{tpu_custom_call.1} parent=42 // pred_region
          %s370 = sand.u32 %s93, 1
          %s371 = scalar_lea.sflag [#allocation4], %s370
          %s372 = sand.u32 %s93, 1
          %s373 = smul.addr %s372, 4
          %s374 = scalar_lea.vmem [#allocation3], %s373
          %375 = dma.done %s371, 64
        $region47: #{tpu_custom_call.1} parent=42 // pred_fallthru
          _
      $region43: #{tpu_custom_call.1} parent=5 // pred_fallthru
        _
    $region6: #{tpu_custom_call.1} parent=1 // loop_footer
      %s15 = sadd.s32 1, %s11
    $region7: #{tpu_custom_call.1} parent=1 // loop_footer_branch
      %10 = sbr.rel target = $region3
    $region8: #{tpu_custom_call.1} parent=1 // loop_exit
      _
    %376 = vsyncpa [#allocation4], 1
    %s377 = scalar_lea.sflag [#allocation4], 1
    %378 = vsyncpa %s377, 1

</llo_original>
